<compile_context>
chip_gen: v6e
topology: v6e:2x2x1
jax: 0.10.0
libtpu: 0.0.40
codegen_flags: <defaults>
</compile_context>

<pallas_src>
import functools

import jax
import jax.numpy as jnp
from jax.experimental import pallas as pl
from jax.experimental.pallas import tpu as pltpu


def _generator_loss_kernel(p_fake_ref, feats_ref, out_ref, acc_ref, *, n, split, block_n):
    # p_fake_ref : [1, n_fake]  lane-dense last prob column of the fake half (resident)
    # feats_ref  : [block_n, D] feature tile for this grid step (double-buffered)
    # out_ref    : [1, 1]       scalar loss
    # acc_ref    : [1, D]       f32 scratch: running sum of w * features
    i = pl.program_id(0)
    n_fake = n - split
    d = acc_ref.shape[1]

    @pl.when(i == 0)
    def _init():
        acc_ref[...] = jnp.zeros_like(acc_ref)

    # ---- fused, single-pass weighted feature reduction ----------------------
    row0 = i * block_n
    rows = row0 + jax.lax.broadcasted_iota(jnp.int32, (block_n, 1), 0)   # global row ids
    feats = feats_ref[...].astype(jnp.float32)
    feats = jnp.where(rows < n, feats, 0.0)                # zero ragged / padded rows
    w = jnp.where(rows < split, 1.0 / split, -1.0 / n_fake).astype(jnp.float32)
    acc_ref[...] += jnp.sum(feats * w, axis=0, keepdims=True)

    # ---- finalize: BCE on the fake probabilities + mean(diff^2) -------------
    @pl.when(i == pl.num_programs(0) - 1)
    def _finalize():
        p = p_fake_ref[...].astype(jnp.float32)            # [1, n_fake], lane-dense
        log1mp = jnp.maximum(jnp.log1p(-p), -100.0)        # PyTorch BCELoss log clamp
        bce = -jnp.sum(log1mp) * (1.0 / n_fake)
        diff = acc_ref[...]
        f_loss = jnp.sum(diff * diff) * (1.0 / d)
        out_ref[...] = jnp.full((1, 1), bce + f_loss, dtype=jnp.float32)


def generator_loss(probs, features, *, block_n=None):
    n, c = probs.shape
    n_f, d = features.shape
    assert n == n_f and n >= 2
    split = n // 2
    n_fake = n - split

    # Only bring the bytes we actually use into the kernel: the last prob column
    # of the fake half, laid out lane-dense as a (1, n_fake) row.
    p_fake = jax.lax.slice(probs, (split, c - 1), (n, c))   # [n_fake, 1]
    p_fake = jnp.reshape(p_fake, (1, n_fake))

    if block_n is None:
        # ~2 MiB per feature block -> <= ~4 MiB double-buffered; safe on all of
        # v5e / v6e / v7x scoped-VMEM defaults without raising vmem_limit_bytes.
        max_rows = max(8, ((2 * 1024 * 1024) // (4 * d)) // 8 * 8)
        block_n = n if n <= max_rows else max_rows
    assert block_n == n or block_n % 8 == 0, "block_n must be 8-aligned or the full batch"

    grid = (pl.cdiv(n, block_n),)
    kernel = functools.partial(_generator_loss_kernel, n=n, split=split, block_n=block_n)

    out = pl.pallas_call(
        kernel,
        out_shape=jax.ShapeDtypeStruct((1, 1), jnp.float32),
        grid_spec=pltpu.PrefetchScalarGridSpec(
            num_scalar_prefetch=0,
            grid=grid,
            in_specs=[
                # constant block index -> DMA'd once, stays resident across the grid
                pl.BlockSpec((1, n_fake), lambda i: (0, 0)),
                pl.BlockSpec((block_n, d), lambda i: (i, 0)),
            ],
            out_specs=pl.BlockSpec((1, 1), lambda i: (0, 0)),
            scratch_shapes=[pltpu.VMEM((1, d), jnp.float32)],
        ),
        compiler_params=pltpu.CompilerParams(
            dimension_semantics=("arbitrary",),   # batch axis is a reduction
        ),
    )(p_fake, features)
    return out[0, 0]


def _reference(probs, features):
    n = probs.shape[0]
    split = n // 2
    p_fake = probs[split:, -1].astype(jnp.float32)
    bce = -jnp.mean(jnp.maximum(jnp.log(1.0 - p_fake), -100.0))
    diff = (jnp.mean(features[:split].astype(jnp.float32), axis=0)
            - jnp.mean(features[split:].astype(jnp.float32), axis=0))
    return bce + jnp.mean(diff * diff)


if __name__ == "__main__":
    key = jax.random.PRNGKey(0)
    k1, k2, k3, k4 = jax.random.split(key, 4)

    # Small case (typical toy usage of the module): whole batch in one block.
    N, C, D = 8, 4, 32
    probs = jax.nn.sigmoid(jax.random.normal(k1, (N, C), dtype=jnp.float32))
    features = jax.random.normal(k2, (N, D), dtype=jnp.float32)
    loss = generator_loss(probs, features)
    jax.block_until_ready(loss)
    ref = _reference(probs, features)
    assert jnp.allclose(loss, ref, rtol=1e-5, atol=1e-5), (loss, ref)

    # Multi-block case: exercises the accumulator path, a ragged final block and
    # a split that is not 8-aligned within a block.
    N2, C2, D2 = 20, 6, 160
    probs2 = jax.nn.sigmoid(jax.random.normal(k3, (N2, C2), dtype=jnp.float32))
    features2 = jax.random.normal(k4, (N2, D2), dtype=jnp.float32)
    loss2 = generator_loss(probs2, features2, block_n=8)
    jax.block_until_ready(loss2)
    ref2 = _reference(probs2, features2)
    assert jnp.allclose(loss2, ref2, rtol=1e-5, atol=1e-5), (loss2, ref2)

    print("KERNEL_OK")
</pallas_src>

<mosaic_0001>
module attributes {stable_mosaic.version = 11 : i64} {
  func.func @_generator_loss_kernel(%arg0: i32, %arg1: memref<1x4xf32, #tpu.memory_space<vmem>>, %arg2: memref<8x32xf32, #tpu.memory_space<vmem>>, %arg3: memref<1x1xf32, #tpu.memory_space<vmem>>, %arg4: memref<1x32xf32, #tpu.memory_space<vmem>>) attributes {dimension_semantics = [#tpu.dimension_semantics<arbitrary>], iteration_bounds = array<i64: 1>, scalar_prefetch = 0 : i64, scratch_operands = 1 : i64, tpu.core_type = #tpu.core_type<tc>, window_params = [{pipeline_mode = #tpu.pipeline_mode<synchronous>, transform_indices = @transform_0, window_bounds = array<i64: 1, 4>}, {transform_indices = @transform_1, window_bounds = array<i64: 8, 32>}, {pipeline_mode = #tpu.pipeline_mode<synchronous>, transform_indices = @transform_2, window_bounds = array<i64: 1, 1>}]} {
    %c0_i32 = arith.constant 0 : i32
    %0 = arith.cmpi eq, %arg0, %c0_i32 : i32
    %1 = arith.extui %0 : i1 to i32
    %c0_i32_0 = arith.constant 0 : i32
    %2 = arith.cmpi ne, %1, %c0_i32_0 : i32
    scf.if %2 {
      %cst_12 = arith.constant 0.000000e+00 : f32
      %29 = vector.broadcast %cst_12 : f32 to vector<1x32xf32>
      %c0_13 = arith.constant 0 : index
      %c0_14 = arith.constant 0 : index
      %30 = vector.load %arg4[%c0_13, %c0_14] : memref<1x32xf32, #tpu.memory_space<vmem>>, vector<1x32xf32>
      tpu.vector_store %arg4[%c0_13, %c0_14], %29 {strides = array<i32>} : memref<1x32xf32, #tpu.memory_space<vmem>>, vector<1x32xf32>,
    } else {
    }
    %c8_i32 = arith.constant 8 : i32
    %3 = arith.muli %arg0, %c8_i32 : i32
    %4 = tpu.iota {dimensions = array<i32: 0>} : vector<8x1xi32>
    %5 = vector.broadcast %3 : i32 to vector<8x1xi32>
    %6 = arith.addi %5, %4 : vector<8x1xi32>
    %c0 = arith.constant 0 : index
    %c0_1 = arith.constant 0 : index
    %7 = vector.load %arg2[%c0, %c0_1] : memref<8x32xf32, #tpu.memory_space<vmem>>, vector<8x32xf32>
    %c8_i32_2 = arith.constant 8 : i32
    %8 = vector.broadcast %c8_i32_2 : i32 to vector<8x1xi32>
    %9 = arith.cmpi slt, %6, %8 : vector<8x1xi32>
    %cst = arith.constant 0.000000e+00 : f32
    %10 = vector.shape_cast %9 : vector<8x1xi1> to vector<8x1xi1>
    %11 = vector.broadcast %10 : vector<8x1xi1> to vector<8x32xi1>
    %12 = vector.broadcast %cst : f32 to vector<8x32xf32>
    %13 = arith.select %11, %7, %12 : vector<8x32xi1>, vector<8x32xf32>
    %c4_i32 = arith.constant 4 : i32
    %14 = vector.broadcast %c4_i32 : i32 to vector<8x1xi32>
    %15 = arith.cmpi slt, %6, %14 : vector<8x1xi32>
    %cst_3 = arith.constant 2.500000e-01 : f32
    %cst_4 = arith.constant -2.500000e-01 : f32
    %16 = vector.broadcast %cst_3 : f32 to vector<8x1xf32>
    %17 = vector.broadcast %cst_4 : f32 to vector<8x1xf32>
    %18 = arith.select %15, %16, %17 : vector<8x1xi1>, vector<8x1xf32>
    %c0_5 = arith.constant 0 : index
    %c0_6 = arith.constant 0 : index
    %19 = vector.load %arg4[%c0_5, %c0_6] : memref<1x32xf32, #tpu.memory_space<vmem>>, vector<1x32xf32>
    %20 = vector.broadcast %18 : vector<8x1xf32> to vector<8x32xf32>
    %21 = arith.mulf %13, %20 : vector<8x32xf32>
    %cst_7 = arith.constant dense<0.000000e+00> : vector<32xf32>
    %22 = vector.multi_reduction <add>, %21, %cst_7 [0] : vector<8x32xf32> to vector<32xf32>
    %23 = vector.shape_cast %22 : vector<32xf32> to vector<1x32xf32>
    %24 = arith.addf %19, %23 : vector<1x32xf32>
    %c0_8 = arith.constant 0 : index
    %c0_9 = arith.constant 0 : index
    %25 = vector.load %arg4[%c0_8, %c0_9] : memref<1x32xf32, #tpu.memory_space<vmem>>, vector<1x32xf32>
    tpu.vector_store %arg4[%c0_8, %c0_9], %24 {strides = array<i32>} : memref<1x32xf32, #tpu.memory_space<vmem>>, vector<1x32xf32>,
    %c0_i32_10 = arith.constant 0 : i32
    %26 = arith.cmpi eq, %arg0, %c0_i32_10 : i32
    %27 = arith.extui %26 : i1 to i32
    %c0_i32_11 = arith.constant 0 : i32
    %28 = arith.cmpi ne, %27, %c0_i32_11 : i32
    scf.if %28 {
      %c0_12 = arith.constant 0 : index
      %c0_13 = arith.constant 0 : index
      %29 = vector.load %arg1[%c0_12, %c0_13] : memref<1x4xf32, #tpu.memory_space<vmem>>, vector<1x4xf32>
      %cst_14 = arith.constant 0.000000e+00 : f32
      %30 = vector.broadcast %cst_14 : f32 to vector<1x4xf32>
      %31 = arith.subf %30, %29 : vector<1x4xf32>
      %32 = math.log1p %31 : vector<1x4xf32>
      %cst_15 = arith.constant -1.000000e+02 : f32
      %33 = vector.broadcast %cst_15 : f32 to vector<1x4xf32>
      %34 = arith.maximumf %32, %33 : vector<1x4xf32>
      %35 = vector.shape_cast %34 : vector<1x4xf32> to vector<1x1x4xf32>
      %cst_16 = arith.constant dense<0.000000e+00> : vector<1xf32>
      %36 = vector.multi_reduction <add>, %35, %cst_16 [1, 2] : vector<1x1x4xf32> to vector<1xf32>
      %37 = vector.shape_cast %36 : vector<1xf32> to vector<1x1x1xf32>
      %38 = vector.extract %37[0, 0, 0] : f32 from vector<1x1x1xf32>
      %cst_17 = arith.constant 0.000000e+00 : f32
      %39 = arith.subf %cst_17, %38 : f32
      %cst_18 = arith.constant 2.500000e-01 : f32
      %40 = arith.mulf %39, %cst_18 : f32
      %c0_19 = arith.constant 0 : index
      %c0_20 = arith.constant 0 : index
      %41 = vector.load %arg4[%c0_19, %c0_20] : memref<1x32xf32, #tpu.memory_space<vmem>>, vector<1x32xf32>
      %42 = arith.mulf %41, %41 : vector<1x32xf32>
      %43 = vector.shape_cast %42 : vector<1x32xf32> to vector<1x1x32xf32>
      %cst_21 = arith.constant dense<0.000000e+00> : vector<1xf32>
      %44 = vector.multi_reduction <add>, %43, %cst_21 [1, 2] : vector<1x1x32xf32> to vector<1xf32>
      %45 = vector.shape_cast %44 : vector<1xf32> to vector<1x1x1xf32>
      %46 = vector.extract %45[0, 0, 0] : f32 from vector<1x1x1xf32>
      %cst_22 = arith.constant 3.125000e-02 : f32
      %47 = arith.mulf %46, %cst_22 : f32
      %48 = arith.addf %40, %47 : f32
      %49 = vector.broadcast %48 : f32 to vector<1x1xf32>
      %c0_23 = arith.constant 0 : index
      %c0_24 = arith.constant 0 : index
      %50 = vector.load %arg3[%c0_23, %c0_24] : memref<1x1xf32, #tpu.memory_space<vmem>>, vector<1x1xf32>
      tpu.vector_store %arg3[%c0_23, %c0_24], %49 {strides = array<i32>} : memref<1x1xf32, #tpu.memory_space<vmem>>, vector<1x1xf32>,
    } else {
    }
    return
  }
  func.func @transform_0(%arg0: i32) -> (i32, i32) {
    %c0_i32 = arith.constant 0 : i32
    %c0_i32_0 = arith.constant 0 : i32
    %c0_i32_1 = arith.constant 0 : i32
    return %c0_i32, %c0_i32_0 : i32, i32
  }
  func.func @transform_1(%arg0: i32) -> (i32, i32) {
    %c0_i32 = arith.constant 0 : i32
    %c0_i32_0 = arith.constant 0 : i32
    return %arg0, %c0_i32 : i32, i32
  }
  func.func @transform_2(%arg0: i32) -> (i32, i32) {
    %c0_i32 = arith.constant 0 : i32
    %c0_i32_0 = arith.constant 0 : i32
    %c0_i32_1 = arith.constant 0 : i32
    return %c0_i32, %c0_i32_0 : i32, i32
  }
}

</mosaic_0001>

<llo_original>
// kernel: tpu_custom_call.1
$region0: #{tpu_custom_call.1}
  #allocation0 [shape = 'u32[]', space=smem, size = 0x4, offset = 0x4, fixed_abs, tag = 'smem constant byte address 0x4 - core index']
  #allocation1 [shape = 'u32[144,128]{1,0:T(1,128)}', space=vmem, size = 0x12000, scoped, tag = 'internal scratch']
  #allocation2 [shape = 'f32[1,32]{1,0:T(1,128)}', space=vmem, size = 0x200, scoped, tag = 'scratch operand']
  %s0 = inlined_call_operand.hbm [shape: f32[1,4], index: 0, kind: input, shape index: {}]
  %s1 = inlined_call_operand.hbm [shape: f32[8,32], index: 1, kind: input, shape index: {}]
  %s2 = inlined_call_operand.hbm [shape: f32[1,1], index: 2, kind: output, shape index: {}]
  %s3 = sld [smem:[#allocation0]]
  $region34: #{tpu_custom_call.1} parent=0
    _
  %s5 = ssub.s32 1, %s3
  %s6 = scalar_select 0, %s5, %s3
  $region1: #{tpu_custom_call.1} parent=0
    #allocation3 [shape = 'u8[512]{0}', space=vmem, size = 0x400, scoped, tag = 'input window, operand 0, single buffered']
    #allocation4 [shape = 's32[1]{0}', space=sflag, size = 0x4, scoped, tag = 'scoped memory for tpu_custom_call.1']
    #allocation5 [shape = 's32[1]{0}', space=sflag, size = 0x4, scoped, tag = 'scoped memory for tpu_custom_call.1']
    #allocation6 [shape = 'u8[4096]{0}', space=vmem, size = 0x1000, scoped, tag = 'input window, operand 1, single buffered']
    #allocation7 [shape = 's32[1]{0}', space=sflag, size = 0x4, scoped, tag = 'scoped memory for tpu_custom_call.1']
    #allocation8 [shape = 'u8[512]{0}', space=vmem, size = 0x400, scoped, tag = 'output window, operand 0, single buffered']
    %7 = vsyncpa [#allocation4], 0
    %8 = vsyncpa [#allocation7], 0
    %9 = vsyncpa [#allocation5], 0
    // Predicated region
    $region2: #{tpu_custom_call.1} parent=1 // pred_check
      _
    $region3: #{tpu_custom_call.1} parent=1 // pred_check_branch
      %11 = sbr.rel (0) target = $region5
    $region4: #{tpu_custom_call.1} parent=1 // pred_region
      %s13 = ssub.s32 16, 16
      %14 = vsyncadd [#allocation4], %s13
      %s16 = sshll.u32 [#allocation3], 4
      %s17 = int_to_ptr.vmem [resolvable:$true] %s16
      %19 = dma.hbm_to_vmem [thread:$0]  %s0, 16, %s17, [#allocation4]
    $region5: #{tpu_custom_call.1} parent=1 // pred_fallthru
      _
    // Predicated region
    $region6: #{tpu_custom_call.1} parent=1 // pred_check
      _
    $region7: #{tpu_custom_call.1} parent=1 // pred_check_branch
      %21 = sbr.rel (0) target = $region9
    $region8: #{tpu_custom_call.1} parent=1 // pred_region
      %s23 = ssub.s32 128, 128
      %24 = vsyncadd [#allocation7], %s23
      %s26 = sshll.u32 [#allocation6], 4
      %s27 = int_to_ptr.vmem [resolvable:$true] %s26
      %29 = dma.hbm_to_vmem [thread:$0]  %s1, 128, %s27, [#allocation7]
    $region9: #{tpu_custom_call.1} parent=1 // pred_fallthru
      _
    // Predicated region
    $region10: #{tpu_custom_call.1} parent=1 // pred_check
      _
    $region11: #{tpu_custom_call.1} parent=1 // pred_check_branch
      %31 = sbr.rel (0) target = $region13
    $region12: #{tpu_custom_call.1} parent=1 // pred_region
      %32 = dma.done [#allocation4], 16
    $region13: #{tpu_custom_call.1} parent=1 // pred_fallthru
      _
    // Predicated region
    $region14: #{tpu_custom_call.1} parent=1 // pred_check
      _
    $region15: #{tpu_custom_call.1} parent=1 // pred_check_branch
      %34 = sbr.rel (0) target = $region17
    $region16: #{tpu_custom_call.1} parent=1 // pred_region
      %35 = dma.done [#allocation7], 128
    $region17: #{tpu_custom_call.1} parent=1 // pred_fallthru
      _
    %p36 = scmp.eq.s32.totalorder 0, 0
    // Predicated region
    $region18: #{tpu_custom_call.1} parent=1 // pred_check
      %p37 = pneg %p36
    $region19: #{tpu_custom_call.1} parent=1 // pred_check_branch
      %39 = sbr.rel (%p37) target = $region21
    $region20: #{tpu_custom_call.1} parent=1 // pred_region
      %vm40 = vcmask 253952
      %41 = vst.msk [vmem:[#allocation2] sm:$0x1] %vm40, 0.0
    $region21: #{tpu_custom_call.1} parent=1 // pred_fallthru
      _
    %s42 = smul.u32 0, 8
    %v43 = vlaneseq
    %v44 = vshrl.u32 %v43, 7
    %v45 = vstv %s42
    %v46 = vadd.s32 %v45, %v44
    %v47 = vld [vmem:[#allocation6] sm:$0xff]
    %vm48 = vcmp.lt.s32.totalorder %v46, 8
    %v49 = vsel %vm48, 1, 0
    %vm50 = vcmp.eq.s32.totalorder %v49, 1
    %v51 = vsel %vm50, %v47, 0.0
    %vm52 = vcmp.lt.s32.totalorder %v46, 4
    %v53 = vsel %vm52, 0.25, -0.25
    %v54 = vld [vmem:[#allocation2] sm:$0x1]
    %v55 = vmul.f32 %v51, %v53
    %vm56 = vcmask 261120
    %v57 = vsel %vm56, %v55, 0.0
    %v58 = vrot.slane %v57, 4
    %v59 = vadd.f32 %v57, %v58
    %v60 = vrot.slane %v59, 2
    %v61 = vadd.f32 %v59, %v60
    %v62 = vrot.slane %v61, 1
    %v63 = vadd.f32 %v61, %v62
    %v64 = vadd.f32 %v54, %v63
    %vm65 = vcmask 253952
    %66 = vst.msk [vmem:[#allocation2] sm:$0x1] %vm65, %v64
    // Predicated region
    $region22: #{tpu_custom_call.1} parent=1 // pred_check
      %p67 = pneg %p36
    $region23: #{tpu_custom_call.1} parent=1 // pred_check_branch
      %69 = sbr.rel (%p67) target = $region25
    $region24: #{tpu_custom_call.1} parent=1 // pred_region
      %v70 = vld [vmem:[#allocation3] sm:$0x1]
      %v71 = vsub.f32 0.0, %v70
      %v72 = vadd.f32 %v71, 1.0
      %v73 = vlog2.pop %v72
      %v74 = vmul.f32 %v73, 0.6931472
      %v75 = vmul.f32 -0.5, %v71
      %v76 = vadd.f32 %v75, 1.0
      %v77 = vmul.f32 %v76, %v71
      %v78 = vand.u32 2147483647, %v71
      %vm79 = vcmp.lt.f32.partialorder %v78, 0.0004427343
      %v80 = vsel %vm79, %v77, %v74
      %v81 = vmax.f32 %v80, -100.0
      %vm82 = vcmask 24576
      %v83 = vsel %vm82, %v81, 0.0
      %84 = vadd.xlane.f32.xlu0 %v83
      %v85 = vpop.xlane.xlu0 %84
      %v86 = vrot.slane %v85, 4
      %v87 = vadd.f32 %v85, %v86
      %v88 = vrot.slane %v87, 2
      %v89 = vadd.f32 %v87, %v88
      %v90 = vrot.slane %v89, 1
      %v91 = vadd.f32 %v89, %v90
      %s92 = vtos %v91
      %s93 = ssub.f32 0.0, %s92
      %s94 = smul.f32 %s93, 0.25
      %v95 = vld [vmem:[#allocation2] sm:$0x1]
      %v96 = vmul.f32 %v95, %v95
      %v97 = vsel %vm65, %v96, 0.0
      %98 = vadd.xlane.f32.xlu0 %v97
      %v99 = vpop.xlane.xlu0 %98
      %v100 = vrot.slane %v99, 4
      %v101 = vadd.f32 %v99, %v100
      %v102 = vrot.slane %v101, 2
      %v103 = vadd.f32 %v101, %v102
      %v104 = vrot.slane %v103, 1
      %v105 = vadd.f32 %v103, %v104
      %s106 = vtos %v105
      %s107 = smul.f32 %s106, 0.03125
      %s108 = sadd.f32 %s94, %s107
      %v109 = vstv %s108
      %vm110 = vcmask 0
      %111 = vst.msk [vmem:[#allocation8] sm:$0x1] %vm110, %v109
    $region25: #{tpu_custom_call.1} parent=1 // pred_fallthru
      _
    // Predicated region
    $region26: #{tpu_custom_call.1} parent=1 // pred_check
      _
    $region27: #{tpu_custom_call.1} parent=1 // pred_check_branch
      %113 = sbr.rel (0) target = $region29
    $region28: #{tpu_custom_call.1} parent=1 // pred_region
      %s115 = ssub.s32 16, 16
      %116 = vsyncadd [#allocation5], %s115
      %s118 = sshll.u32 [#allocation8], 4
      %s119 = int_to_ptr.vmem [resolvable:$true] %s118
      %121 = dma.vmem_to_hbm [thread:$0]  %s119, 16, %s2, [#allocation5]
    $region29: #{tpu_custom_call.1} parent=1 // pred_fallthru
      _
    // Predicated region
    $region30: #{tpu_custom_call.1} parent=1 // pred_check
      _
    $region31: #{tpu_custom_call.1} parent=1 // pred_check_branch
      %123 = sbr.rel (0) target = $region33
    $region32: #{tpu_custom_call.1} parent=1 // pred_region
      %124 = dma.done [#allocation5], 16
    $region33: #{tpu_custom_call.1} parent=1 // pred_fallthru
      _
    %125 = vsyncpa [#allocation4], 1
    %126 = vsyncpa [#allocation7], 1
    %127 = vsyncpa [#allocation5], 1

</llo_original>
